<compile_context>
chip_gen: v6e
topology: v6e:2x2x1
jax: 0.10.0
libtpu: 0.0.40
codegen_flags: <defaults>
</compile_context>

<pallas_src>
import jax
import jax.numpy as jnp
from jax.experimental import pallas as pl
from jax.experimental.pallas import tpu as pltpu

_LANES = 128


def _budgets():
    """Per-generation (tile_budget_bytes, vmem_limit_bytes)."""
    try:
        cap = int(pltpu.get_tpu_info().vmem_capacity_bytes)
    except Exception:
        cap = 64 << 20                       # conservative (v7x-sized) fallback
    if cap >= (96 << 20):                    # v5e / v6e: 128 MiB VMEM
        return 8 << 20, 64 << 20
    return 4 << 20, 40 << 20                 # v7x: 64 MiB VMEM per TensorCore


def _pick_block_rows(rows, channels, itemsize, budget_bytes):
    """Largest sublane-aligned block-row count that fits the budget (no full-dim OOM fallback)."""
    align = max(8, 32 // max(1, itemsize))   # 8 for f32, 16 for bf16, 32 for int8/fp8
    bytes_per_row = channels * _LANES * itemsize
    max_rows = max(align, (budget_bytes // bytes_per_row) // align * align)
    if rows < 2 * align:
        return rows                          # tiny image: one full-dim block (always legal)
    half = -(-rows // 2)                     # allow a 2-way split across v7x TensorCores
    half = -(-half // align) * align
    return min(max_rows, half)


def _make_kernel(C, R, L, rows, nb, steps, need_mask, acc_rows):
    def kernel(x_ref, y_ref, out_ref, acc_ref):
        j = pl.program_id(2)

        @pl.when(j == 0)
        def _():
            acc_ref[...] = jnp.zeros_like(acc_ref)

        # Native-dtype DMA; cast after the load (accumulation stays f32).
        x = x_ref[...].astype(jnp.float32)       # (1, C, R, L)
        y = y_ref[...].astype(jnp.float32)
        # Fused channel sums: d = sum_c(x - y); the 1/C^2 is folded into the wrapper.
        d = jnp.sum(x - y, axis=1)[0]            # (R, L) — major-axis VPU adds only
        dsq = d * d

        if need_mask:
            # Zero contributions from ragged / overshoot block rows (use where,
            # not multiply: edge rows may contain garbage / non-finite bits).
            h = pl.program_id(1)
            block_id = h * steps + j
            row0 = jnp.minimum(block_id, nb - 1) * R
            limit = jnp.where(block_id < nb, rows, 0)
            row_ids = jax.lax.broadcasted_iota(jnp.int32, (R, L), 0) + row0
            dsq = jnp.where(row_ids < limit, dsq, 0.0)

        if acc_rows != R:                        # fold sublane groups: (R, L) -> (8, L)
            dsq = dsq.reshape(R // 8, 8, L).sum(axis=0)
        acc_ref[...] += dsq                      # elementwise accumulate in VMEM

        @pl.when(j == pl.num_programs(2) - 1)
        def _():
            # One cross-sublane reduce per (image, split); lane reduce in wrapper.
            out_ref[...] = jnp.sum(acc_ref[...], axis=0, keepdims=True)[None, None]

    return kernel


def grayscale_loss(x, y, *, tile_budget_bytes=None, vmem_limit_bytes=None):
    assert x.shape == y.shape, "kernel assumes identical shapes"
    N, C, H, W = x.shape
    HW = H * W
    itemsize = max(jnp.dtype(x.dtype).itemsize, jnp.dtype(y.dtype).itemsize)

    auto_tile, auto_vmem = _budgets()
    tile_budget_bytes = tile_budget_bytes or auto_tile
    vmem_limit_bytes = vmem_limit_bytes or auto_vmem

    main = (HW // _LANES) * _LANES               # lane-dense portion of each image
    rows = main // _LANES

    sse = jnp.float32(0.0)
    if rows > 0:
        # Contiguous reshape only (pure metadata when HW % 128 == 0); native dtype.
        if main == HW:
            x4 = x.reshape(N, C, rows, _LANES)
            y4 = y.reshape(N, C, rows, _LANES)
        else:
            x4 = x.reshape(N, C, HW)[:, :, :main].reshape(N, C, rows, _LANES)
            y4 = y.reshape(N, C, HW)[:, :, :main].reshape(N, C, rows, _LANES)

        R = _pick_block_rows(rows, C, itemsize, tile_budget_bytes)
        nb = -(-rows // R)                       # blocks along the row axis (cdiv)
        n_splits = 2 if nb >= 2 else 1           # spatial split keeps both v7x cores busy at N=1
        steps = -(-nb // n_splits)
        need_mask = (nb * R != rows) or (n_splits * steps != nb)
        acc_rows = 8 if (R % 8 == 0 and R > 8) else R

        if n_splits * steps != nb:               # only clamp when the split overshoots
            in_map = lambda n, h, j: (n, 0, jnp.minimum(h * steps + j, nb - 1), 0)
        else:
            in_map = lambda n, h, j: (n, 0, h * steps + j, 0)
        in_spec = pl.BlockSpec((1, C, R, _LANES), in_map)
        out_spec = pl.BlockSpec((1, 1, 1, _LANES), lambda n, h, j: (n, h, 0, 0))

        cost = pl.CostEstimate(
            flops=4 * N * C * rows * _LANES,
            transcendentals=0,
            bytes_accessed=2 * N * C * rows * _LANES * itemsize
                           + N * n_splits * _LANES * 4,
        )

        partial = pl.pallas_call(
            _make_kernel(C, R, _LANES, rows, nb, steps, need_mask, acc_rows),
            out_shape=jax.ShapeDtypeStruct((N, n_splits, 1, _LANES), jnp.float32),
            grid_spec=pltpu.PrefetchScalarGridSpec(
                num_scalar_prefetch=0,
                grid=(N, n_splits, steps),
                in_specs=[in_spec, in_spec],
                out_specs=out_spec,
                scratch_shapes=[pltpu.VMEM((acc_rows, _LANES), jnp.float32)],
            ),
            compiler_params=pltpu.CompilerParams(
                dimension_semantics=("parallel", "parallel", "arbitrary"),
                vmem_limit_bytes=vmem_limit_bytes,
            ),
            cost_estimate=cost,
        )(x4, y4)
        sse = jnp.sum(partial)                   # sum over images, splits, lanes

    if main < HW:
        # TODO(synk): <128-pixel ragged tail is summed with plain jnp (tiny).
        xt = x.reshape(N, C, HW)[:, :, main:].astype(jnp.float32)
        yt = y.reshape(N, C, HW)[:, :, main:].astype(jnp.float32)
        dt = jnp.sum(xt - yt, axis=1)
        sse = sse + jnp.sum(dt * dt)

    # d = sum_c(x - y) = C * (x_g - y_g)  =>  MSE = sse / (C^2 * N * H * W).
    mse = sse / jnp.float32(C * C * N * HW)
    return 1.0 / mse                             # matches torch: 1 / MSE (Inf if x == y)


if __name__ == "__main__":
    key = jax.random.PRNGKey(0)
    k1, k2 = jax.random.split(key)

    # NCHW inputs.
    shape = (2, 4, 16, 16)
    x = jax.random.normal(k1, shape, dtype=jnp.float32)
    y = jax.random.normal(k2, shape, dtype=jnp.float32)

    out = jax.block_until_ready(grayscale_loss(x, y))

    # Pure-JAX reference of the torch forward.
    xg = jnp.mean(x, axis=1, keepdims=True)
    yg = jnp.mean(y, axis=1, keepdims=True)
    ref = 1.0 / jnp.mean((xg - yg) ** 2)
    assert jnp.allclose(out, ref, rtol=1e-5, atol=1e-6), (out, ref)

    print("KERNEL_OK")
</pallas_src>

<mosaic_0001>
module attributes {stable_mosaic.version = 11 : i64} {
  func.func @kernel(%arg0: i32, %arg1: i32, %arg2: i32, %arg3: memref<1x4x2x128xf32, #tpu.memory_space<vmem>>, %arg4: memref<1x4x2x128xf32, #tpu.memory_space<vmem>>, %arg5: memref<1x1x1x128xf32, #tpu.memory_space<vmem>>, %arg6: memref<2x128xf32, #tpu.memory_space<vmem>>) attributes {dimension_semantics = [#tpu.dimension_semantics<parallel>, #tpu.dimension_semantics<parallel>, #tpu.dimension_semantics<arbitrary>], iteration_bounds = array<i64: 2, 1, 1>, scalar_prefetch = 0 : i64, scratch_operands = 1 : i64, tpu.core_type = #tpu.core_type<tc>, window_params = [{transform_indices = @transform_0, window_bounds = array<i64: 1, 4, 2, 128>}, {transform_indices = @transform_1, window_bounds = array<i64: 1, 4, 2, 128>}, {transform_indices = @transform_2, window_bounds = array<i64: 1, 1, 1, 128>}]} {
    %c0_i32 = arith.constant 0 : i32
    %0 = arith.cmpi eq, %arg2, %c0_i32 : i32
    %1 = arith.extui %0 : i1 to i32
    %c0_i32_0 = arith.constant 0 : i32
    %2 = arith.cmpi ne, %1, %c0_i32_0 : i32
    scf.if %2 {
      %cst_14 = arith.constant 0.000000e+00 : f32
      %15 = vector.broadcast %cst_14 : f32 to vector<2x128xf32>
      %c0_15 = arith.constant 0 : index
      %c0_16 = arith.constant 0 : index
      %16 = vector.load %arg6[%c0_15, %c0_16] : memref<2x128xf32, #tpu.memory_space<vmem>>, vector<2x128xf32>
      tpu.vector_store %arg6[%c0_15, %c0_16], %15 {strides = array<i32>} : memref<2x128xf32, #tpu.memory_space<vmem>>, vector<2x128xf32>,
    } else {
    }
    %c0 = arith.constant 0 : index
    %c0_1 = arith.constant 0 : index
    %c0_2 = arith.constant 0 : index
    %c0_3 = arith.constant 0 : index
    %3 = vector.load %arg3[%c0, %c0_1, %c0_2, %c0_3] : memref<1x4x2x128xf32, #tpu.memory_space<vmem>>, vector<1x4x2x128xf32>
    %c0_4 = arith.constant 0 : index
    %c0_5 = arith.constant 0 : index
    %c0_6 = arith.constant 0 : index
    %c0_7 = arith.constant 0 : index
    %4 = vector.load %arg4[%c0_4, %c0_5, %c0_6, %c0_7] : memref<1x4x2x128xf32, #tpu.memory_space<vmem>>, vector<1x4x2x128xf32>
    %5 = arith.subf %3, %4 : vector<1x4x2x128xf32>
    %cst = arith.constant dense<0.000000e+00> : vector<1x2x128xf32>
    %6 = vector.multi_reduction <add>, %5, %cst [1] : vector<1x4x2x128xf32> to vector<1x2x128xf32>
    %7 = vector.shape_cast %6 : vector<1x2x128xf32> to vector<2x128xf32>
    %8 = arith.mulf %7, %7 : vector<2x128xf32>
    %c0_8 = arith.constant 0 : index
    %c0_9 = arith.constant 0 : index
    %9 = vector.load %arg6[%c0_8, %c0_9] : memref<2x128xf32, #tpu.memory_space<vmem>>, vector<2x128xf32>
    %10 = arith.addf %9, %8 : vector<2x128xf32>
    %c0_10 = arith.constant 0 : index
    %c0_11 = arith.constant 0 : index
    %11 = vector.load %arg6[%c0_10, %c0_11] : memref<2x128xf32, #tpu.memory_space<vmem>>, vector<2x128xf32>
    tpu.vector_store %arg6[%c0_10, %c0_11], %10 {strides = array<i32>} : memref<2x128xf32, #tpu.memory_space<vmem>>, vector<2x128xf32>,
    %c0_i32_12 = arith.constant 0 : i32
    %12 = arith.cmpi eq, %arg2, %c0_i32_12 : i32
    %13 = arith.extui %12 : i1 to i32
    %c0_i32_13 = arith.constant 0 : i32
    %14 = arith.cmpi ne, %13, %c0_i32_13 : i32
    scf.if %14 {
      %c0_14 = arith.constant 0 : index
      %c0_15 = arith.constant 0 : index
      %15 = vector.load %arg6[%c0_14, %c0_15] : memref<2x128xf32, #tpu.memory_space<vmem>>, vector<2x128xf32>
      %cst_16 = arith.constant dense<0.000000e+00> : vector<128xf32>
      %16 = vector.multi_reduction <add>, %15, %cst_16 [0] : vector<2x128xf32> to vector<128xf32>
      %17 = vector.shape_cast %16 : vector<128xf32> to vector<1x128xf32>
      %18 = vector.shape_cast %17 : vector<1x128xf32> to vector<1x1x1x128xf32>
      %c0_17 = arith.constant 0 : index
      %c0_18 = arith.constant 0 : index
      %c0_19 = arith.constant 0 : index
      %c0_20 = arith.constant 0 : index
      %19 = vector.load %arg5[%c0_17, %c0_18, %c0_19, %c0_20] : memref<1x1x1x128xf32, #tpu.memory_space<vmem>>, vector<1x1x1x128xf32>
      tpu.vector_store %arg5[%c0_17, %c0_18, %c0_19, %c0_20], %18 {strides = array<i32>} : memref<1x1x1x128xf32, #tpu.memory_space<vmem>>, vector<1x1x1x128xf32>,
    } else {
    }
    return
  }
  func.func @transform_0(%arg0: i32, %arg1: i32, %arg2: i32) -> (i32, i32, i32, i32) {
    %c1_i32 = arith.constant 1 : i32
    %0 = arith.muli %arg1, %c1_i32 : i32
    %1 = arith.addi %0, %arg2 : i32
    %c0_i32 = arith.constant 0 : i32
    %c0_i32_0 = arith.constant 0 : i32
    %c0_i32_1 = arith.constant 0 : i32
    return %arg0, %c0_i32, %1, %c0_i32_0 : i32, i32, i32, i32
  }
  func.func @transform_1(%arg0: i32, %arg1: i32, %arg2: i32) -> (i32, i32, i32, i32) {
    %c1_i32 = arith.constant 1 : i32
    %0 = arith.muli %arg1, %c1_i32 : i32
    %1 = arith.addi %0, %arg2 : i32
    %c0_i32 = arith.constant 0 : i32
    %c0_i32_0 = arith.constant 0 : i32
    %c0_i32_1 = arith.constant 0 : i32
    return %arg0, %c0_i32, %1, %c0_i32_0 : i32, i32, i32, i32
  }
  func.func @transform_2(%arg0: i32, %arg1: i32, %arg2: i32) -> (i32, i32, i32, i32) {
    %c0_i32 = arith.constant 0 : i32
    %c0_i32_0 = arith.constant 0 : i32
    %c0_i32_1 = arith.constant 0 : i32
    return %arg0, %arg1, %c0_i32, %c0_i32_0 : i32, i32, i32, i32
  }
}

</mosaic_0001>

<llo_original>
// kernel: tpu_custom_call.1
$region0: #{tpu_custom_call.1}
  #allocation0 [shape = 'u32[]', space=smem, size = 0x4, offset = 0x4, fixed_abs, tag = 'smem constant byte address 0x4 - core index']
  #allocation1 [shape = 'u32[144,128]{1,0:T(1,128)}', space=vmem, size = 0x12000, scoped, tag = 'internal scratch']
  #allocation2 [shape = 'f32[2,128]{1,0:T(2,128)}', space=vmem, size = 0x400, scoped, tag = 'scratch operand']
  %s0 = inlined_call_operand.hbm [shape: f32[2,4,2,128], index: 0, kind: input, shape index: {}]
  %s1 = inlined_call_operand.hbm [shape: f32[2,4,2,128], index: 1, kind: input, shape index: {}]
  %s2 = inlined_call_operand.hbm [shape: f32[2,1,1,128], index: 2, kind: output, shape index: {}]
  %s3 = sld [smem:[#allocation0]]
  $region57: #{tpu_custom_call.1} parent=0
    _
  %s5 = ssub.s32 1, %s3
  %s6 = scalar_select 0, %s5, %s3
  $region1: #{tpu_custom_call.1} parent=0
    #allocation3 [shape = 'u8[8192]{0}', space=vmem, size = 0x2000, scoped, tag = 'input window, operand 0']
    #allocation4 [shape = 's32[2]{0}', space=sflag, size = 0x8, scoped, tag = 'scoped memory for tpu_custom_call.1']
    #allocation5 [shape = 's32[2]{0}', space=sflag, size = 0x8, scoped, tag = 'scoped memory for tpu_custom_call.1']
    #allocation6 [shape = 'u8[8192]{0}', space=vmem, size = 0x2000, scoped, tag = 'input window, operand 1']
    #allocation7 [shape = 's32[2]{0}', space=sflag, size = 0x8, scoped, tag = 'scoped memory for tpu_custom_call.1']
    #allocation8 [shape = 'u8[1024]{0}', space=vmem, size = 0x400, scoped, tag = 'output window, operand 0']
    %7 = vsyncpa [#allocation4], 0
    %s8 = scalar_lea.sflag [#allocation4], 1
    %9 = vsyncpa %s8, 0
    %10 = vsyncpa [#allocation7], 0
    %s11 = scalar_lea.sflag [#allocation7], 1
    %12 = vsyncpa %s11, 0
    %13 = vsyncpa [#allocation5], 0
    %s14 = scalar_lea.sflag [#allocation5], 1
    %15 = vsyncpa %s14, 0
    loop: start=0, step=1, limit=4
    $region2: #{tpu_custom_call.1} parent=1 // loop_pre_header
      _
    $region3: #{tpu_custom_call.1} parent=1 // loop_header
      %s17 = sphi 0, %s21
      %p18 = scmp.ge.s32.totalorder %s17, 4
      %s24 = sphi 0, %s43
      %s25 = sphi 0, %s39
      %s26 = sphi 0, %s35
      %s27 = sphi 0, %s24
      %s28 = sphi 0, %s25
      %s29 = sphi 0, %s26
      %s30 = sphi 0, %s27
      %s31 = sphi 0, %s28
      %s32 = sphi 0, %s29
      %s50 = sphi 0, %s52
      %s53 = sphi 0, %s50
      %s54 = sphi 0, %s53
      %s70 = sphi 0, %s54
      %s80 = sphi 0, %s82
      %s83 = sphi 0, %s80
      %s84 = sphi 0, %s83
      %s100 = sphi 0, %s84
      %s108 = sphi 0, %s110
      %s111 = sphi 0, %s108
      %s112 = sphi 0, %s111
      %s128 = sphi 0, %s112
    $region4: #{tpu_custom_call.1} parent=1 // loop_header_branch
      %20 = sbr.rel (%p18) target = $region8
    $region5: #{tpu_custom_call.1} parent=1 // loop_body
      %s22 = ssub.s32 %s17, 1
      %s23 = ssub.s32 %s17, 2
      %s33 = sadd.s32 1, %s26
      %p34 = scmp.ge.s32.totalorder %s33, 1
      %s35 = scalar_select %p34, 0, %s33
      %s36 = sadd.s32 1, %s25
      %s37 = scalar_select %p34, %s36, %s25
      %p38 = scmp.ge.s32.totalorder %s37, 1
      %s39 = scalar_select %p38, 0, %s37
      %s40 = sadd.s32 1, %s24
      %s41 = scalar_select %p38, %s40, %s24
      %p42 = scmp.ge.s32.totalorder %s41, 2
      %s43 = scalar_select %p42, 0, %s41
      %s44 = sadd.s32 %s25, %s26
      %s45 = sadd.s32 %s39, %s35
      %s46 = ssub.s32 %s24, %s43
      %s47 = ssub.s32 %s44, %s45
      %s48 = sor.u32 %s46, %s47
      %p49 = scmp.eq.s32.totalorder %s48, 0
      %s51 = sadd.s32 %s50, 1
      %s52 = scalar_select %p49, %s50, %s51
      %p55 = pneg %p49
      %p56 = scmp.eq.s32.totalorder %s17, 1
      %p57 = por %p55, %p56
      %p58 = scmp.ne.s32.totalorder %s50, %s53
      %p59 = scmp.eq.s32.totalorder %s17, 0
      %p60 = por %p58, %p59
      %p61 = scmp.ne.s32.totalorder %s50, %s53
      %p62 = scmp.eq.s32.totalorder %s22, 1
      %p63 = por %p61, %p62
      %p64 = scmp.ne.s32.totalorder %s53, %s54
      %p65 = scmp.eq.s32.totalorder %s22, 0
      %p66 = por %p64, %p65
      %p67 = scmp.ne.s32.totalorder %s53, %s54
      %p68 = scmp.eq.s32.totalorder %s23, 1
      %p69 = por %p67, %p68
      %p71 = scmp.ne.s32.totalorder %s54, %s70
      %p72 = scmp.eq.s32.totalorder %s23, 0
      %p73 = por %p71, %p72
      %s74 = sadd.s32 %s25, %s26
      %s75 = sadd.s32 %s39, %s35
      %s76 = ssub.s32 %s24, %s43
      %s77 = ssub.s32 %s74, %s75
      %s78 = sor.u32 %s76, %s77
      %p79 = scmp.eq.s32.totalorder %s78, 0
      %s81 = sadd.s32 %s80, 1
      %s82 = scalar_select %p79, %s80, %s81
      %p85 = pneg %p79
      %p86 = scmp.eq.s32.totalorder %s17, 1
      %p87 = por %p85, %p86
      %p88 = scmp.ne.s32.totalorder %s80, %s83
      %p89 = scmp.eq.s32.totalorder %s17, 0
      %p90 = por %p88, %p89
      %p91 = scmp.ne.s32.totalorder %s80, %s83
      %p92 = scmp.eq.s32.totalorder %s22, 1
      %p93 = por %p91, %p92
      %p94 = scmp.ne.s32.totalorder %s83, %s84
      %p95 = scmp.eq.s32.totalorder %s22, 0
      %p96 = por %p94, %p95
      %p97 = scmp.ne.s32.totalorder %s83, %s84
      %p98 = scmp.eq.s32.totalorder %s23, 1
      %p99 = por %p97, %p98
      %p101 = scmp.ne.s32.totalorder %s84, %s100
      %p102 = scmp.eq.s32.totalorder %s23, 0
      %p103 = por %p101, %p102
      %s104 = ssub.s32 %s24, %s43
      %s105 = ssub.s32 %s25, %s39
      %s106 = sor.u32 %s104, %s105
      %p107 = scmp.eq.s32.totalorder %s106, 0
      %s109 = sadd.s32 %s108, 1
      %s110 = scalar_select %p107, %s108, %s109
      %p113 = pneg %p107
      %p114 = scmp.eq.s32.totalorder %s17, 1
      %p115 = por %p113, %p114
      %p116 = scmp.ne.s32.totalorder %s108, %s111
      %p117 = scmp.eq.s32.totalorder %s17, 0
      %p118 = por %p116, %p117
      %p119 = scmp.ne.s32.totalorder %s108, %s111
      %p120 = scmp.eq.s32.totalorder %s22, 1
      %p121 = por %p119, %p120
      %p122 = scmp.ne.s32.totalorder %s111, %s112
      %p123 = scmp.eq.s32.totalorder %s22, 0
      %p124 = por %p122, %p123
      %p125 = scmp.ne.s32.totalorder %s111, %s112
      %p126 = scmp.eq.s32.totalorder %s23, 1
      %p127 = por %p125, %p126
      %p129 = scmp.ne.s32.totalorder %s112, %s128
      %p130 = scmp.eq.s32.totalorder %s23, 0
      %p131 = por %p129, %p130
      %p132 = scmp.le.s32.totalorder 1, %s17
      %p133 = scmp.lt.s32.totalorder %s17, 3
      %p134 = pnand %p132, %p133
      %p135 = pneg %p134
      // Predicated region
      $region9: #{tpu_custom_call.1} parent=5 // pred_check
        _
      $region10: #{tpu_custom_call.1} parent=5 // pred_check_branch
        %137 = sbr.rel (%p134) target = $region12
      $region11: #{tpu_custom_call.1} parent=5 // pred_region
        %s138 = ssub.s32 %s17, 1
      $region12: #{tpu_custom_call.1} parent=5 // pred_fallthru
        _
      %p139 = scmp.lt.s32.totalorder %s17, 2
      // Predicated region
      $region13: #{tpu_custom_call.1} parent=5 // pred_check
        %p140 = pneg %p139
      $region14: #{tpu_custom_call.1} parent=5 // pred_check_branch
        %142 = sbr.rel (%p140) target = $region16
      $region15: #{tpu_custom_call.1} parent=5 // pred_region
        // Predicated region
        $region17: #{tpu_custom_call.1} parent=15 // pred_check
          %p143 = pneg %p60
        $region18: #{tpu_custom_call.1} parent=15 // pred_check_branch
          %145 = sbr.rel (%p143) target = $region20
        $region19: #{tpu_custom_call.1} parent=15 // pred_region
          %s146 = sand.u32 %s50, 1
          %s147 = scalar_lea.sflag [#allocation4], %s146
          %s148 = sand.u32 %s50, 1
          %s149 = smul.addr %s148, 8
          %s150 = scalar_lea.vmem [#allocation3], %s149
          %s151 = sadd.s32 %s25, %s26
          %s153 = ssub.s32 128, 128
          %154 = vsyncadd %s147, %s153
          %s155 = smul.addr %s24, 4
          %s156 = sadd.s32 %s151, %s155
          %s157 = smul.addr %s156, 32
          %s158 = scalar_lea.hbm %s0, %s157
          %s159 = sshll.u32 %s150, 4
          %s160 = int_to_ptr.vmem [resolvable:$true] %s159
          %165 = dma.hbm_to_vmem [thread:$0]  %s158, 128, %s160, %s147, 32, 32, 2
        $region20: #{tpu_custom_call.1} parent=15 // pred_fallthru
          _
        // Predicated region
        $region21: #{tpu_custom_call.1} parent=15 // pred_check
          %p166 = pneg %p90
        $region22: #{tpu_custom_call.1} parent=15 // pred_check_branch
          %168 = sbr.rel (%p166) target = $region24
        $region23: #{tpu_custom_call.1} parent=15 // pred_region
          %s169 = sand.u32 %s80, 1
          %s170 = scalar_lea.sflag [#allocation7], %s169
          %s171 = sand.u32 %s80, 1
          %s172 = smul.addr %s171, 8
          %s173 = scalar_lea.vmem [#allocation6], %s172
          %s174 = sadd.s32 %s25, %s26
          %s176 = ssub.s32 128, 128
          %177 = vsyncadd %s170, %s176
          %s178 = smul.addr %s24, 4
          %s179 = sadd.s32 %s174, %s178
          %s180 = smul.addr %s179, 32
          %s181 = scalar_lea.hbm %s1, %s180
          %s182 = sshll.u32 %s173, 4
          %s183 = int_to_ptr.vmem [resolvable:$true] %s182
          %188 = dma.hbm_to_vmem [thread:$0]  %s181, 128, %s183, %s170, 32, 32, 2
        $region24: #{tpu_custom_call.1} parent=15 // pred_fallthru
          _
      $region16: #{tpu_custom_call.1} parent=5 // pred_fallthru
        _
      %p189 = scmp.le.s32.totalorder 1, %s17
      %p190 = scmp.lt.s32.totalorder %s17, 3
      %p191 = pnand %p189, %p190
      %p192 = pneg %p191
      // Predicated region
      $region25: #{tpu_custom_call.1} parent=5 // pred_check
        _
      $region26: #{tpu_custom_call.1} parent=5 // pred_check_branch
        %194 = sbr.rel (%p191) target = $region28
      $region27: #{tpu_custom_call.1} parent=5 // pred_region
        %s195 = ssub.s32 %s17, 1
        %s196 = sand.u32 %s53, 1
        %s197 = scalar_lea.sflag [#allocation4], %s196
        %s198 = sand.u32 %s53, 1
        %s199 = smul.addr %s198, 8
        %s200 = scalar_lea.vmem [#allocation3], %s199
        // Predicated region
        $region29: #{tpu_custom_call.1} parent=27 // pred_check
          %p201 = pneg %p66
        $region30: #{tpu_custom_call.1} parent=27 // pred_check_branch
          %203 = sbr.rel (%p201) target = $region32
        $region31: #{tpu_custom_call.1} parent=27 // pred_region
          %204 = dma.done %s197, 128
        $region32: #{tpu_custom_call.1} parent=27 // pred_fallthru
          _
        %s205 = sand.u32 %s83, 1
        %s206 = scalar_lea.sflag [#allocation7], %s205
        %s207 = sand.u32 %s83, 1
        %s208 = smul.addr %s207, 8
        %s209 = scalar_lea.vmem [#allocation6], %s208
        // Predicated region
        $region33: #{tpu_custom_call.1} parent=27 // pred_check
          %p210 = pneg %p96
        $region34: #{tpu_custom_call.1} parent=27 // pred_check_branch
          %212 = sbr.rel (%p210) target = $region36
        $region35: #{tpu_custom_call.1} parent=27 // pred_region
          %213 = dma.done %s206, 128
        $region36: #{tpu_custom_call.1} parent=27 // pred_fallthru
          _
        %s214 = sand.u32 %s53, 1
        %s215 = scalar_lea.sflag [#allocation4], %s214
        %s216 = sand.u32 %s53, 1
        %s217 = smul.addr %s216, 8
        %s218 = scalar_lea.vmem [#allocation3], %s217
        %p219 = pneg %p66
        %p220 = pneg %p63
        %s221 = sand.u32 %s83, 1
        %s222 = scalar_lea.sflag [#allocation7], %s221
        %s223 = sand.u32 %s83, 1
        %s224 = smul.addr %s223, 8
        %s225 = scalar_lea.vmem [#allocation6], %s224
        %p226 = pneg %p96
        %p227 = pneg %p93
        %p228 = pneg %p124
        %p229 = pneg %p121
        %s230 = sand.u32 %s111, 1
        %s231 = scalar_lea.sflag [#allocation5], %s230
        %s232 = sand.u32 %s111, 1
        %s233 = scalar_lea.vmem [#allocation8], %s232
        %s234 = sadd.s32 %s28, %s29
        %s235 = sadd.s32 %s28, %s29
        %p236 = scmp.eq.s32.totalorder %s29, 0
        // Predicated region
        $region37: #{tpu_custom_call.1} parent=27 // pred_check
          %p237 = pneg %p236
        $region38: #{tpu_custom_call.1} parent=27 // pred_check_branch
          %239 = sbr.rel (%p237) target = $region40
        $region39: #{tpu_custom_call.1} parent=27 // pred_region
          %240 = vst [vmem:[#allocation2] sm:$0x3] 0.0
        $region40: #{tpu_custom_call.1} parent=27 // pred_fallthru
          _
        %v241 = vld [vmem:[%s200] sm:$0x3]
        %v242 = vld [vmem:[%s200 + $0x2] sm:$0x3]
        %v243 = vld [vmem:[%s200 + $0x4] sm:$0x3]
        %v244 = vld [vmem:[%s200 + $0x6] sm:$0x3]
        %v245 = vld [vmem:[%s209] sm:$0x3]
        %v246 = vld [vmem:[%s209 + $0x2] sm:$0x3]
        %v247 = vld [vmem:[%s209 + $0x4] sm:$0x3]
        %v248 = vld [vmem:[%s209 + $0x6] sm:$0x3]
        %v249 = vsub.f32 %v241, %v245
        %v250 = vsub.f32 %v242, %v246
        %v251 = vsub.f32 %v243, %v247
        %v252 = vsub.f32 %v244, %v248
        %vm253 = vcmask 1041408
        %v254 = vsel %vm253, %v249, 0.0
        %v255 = vsel %vm253, %v250, 0.0
        %v256 = vadd.f32 %v254, %v255
        %v257 = vsel %vm253, %v251, 0.0
        %v258 = vadd.f32 %v256, %v257
        %v259 = vsel %vm253, %v252, 0.0
        %v260 = vadd.f32 %v258, %v259
        %v261 = vmul.f32 %v260, %v260
        %v262 = vld [vmem:[#allocation2] sm:$0x3]
        %v263 = vadd.f32 %v262, %v261
        %264 = vst [vmem:[#allocation2] sm:$0x3] %v263
        // Predicated region
        $region41: #{tpu_custom_call.1} parent=27 // pred_check
          %p265 = pneg %p236
        $region42: #{tpu_custom_call.1} parent=27 // pred_check_branch
          %267 = sbr.rel (%p265) target = $region44
        $region43: #{tpu_custom_call.1} parent=27 // pred_region
          %v268 = vld [vmem:[#allocation2] sm:$0x3]
          %v269 = vsel %vm253, %v268, 0.0
          %v270 = vrot.slane %v269, 4
          %v271 = vadd.f32 %v269, %v270
          %v272 = vrot.slane %v271, 2
          %v273 = vadd.f32 %v271, %v272
          %v274 = vrot.slane %v273, 1
          %v275 = vadd.f32 %v273, %v274
          %276 = vst [vmem:[%s233] sm:$0x1] %v275
        $region44: #{tpu_custom_call.1} parent=27 // pred_fallthru
          _
        %s277 = sand.u32 %s111, 1
        %s278 = scalar_lea.sflag [#allocation5], %s277
        %s279 = sand.u32 %s111, 1
        %s280 = scalar_lea.vmem [#allocation8], %s279
        // Predicated region
        $region45: #{tpu_custom_call.1} parent=27 // pred_check
          %p281 = pneg %p121
        $region46: #{tpu_custom_call.1} parent=27 // pred_check_branch
          %283 = sbr.rel (%p281) target = $region48
        $region47: #{tpu_custom_call.1} parent=27 // pred_region
          %s285 = ssub.s32 16, 16
          %286 = vsyncadd %s278, %s285
          %s287 = sadd.s32 %s28, %s27
          %s288 = smul.addr %s287, 16
          %s289 = scalar_lea.hbm %s2, %s288
          %s291 = sshll.u32 %s280, 4
          %s292 = int_to_ptr.vmem [resolvable:$true] %s291
          %294 = dma.vmem_to_hbm [thread:$0]  %s292, 16, %s289, %s278
        $region48: #{tpu_custom_call.1} parent=27 // pred_fallthru
          _
      $region28: #{tpu_custom_call.1} parent=5 // pred_fallthru
        _
      %p295 = scmp.le.s32.totalorder 2, %s17
      // Predicated region
      $region49: #{tpu_custom_call.1} parent=5 // pred_check
        %p296 = pneg %p295
      $region50: #{tpu_custom_call.1} parent=5 // pred_check_branch
        %298 = sbr.rel (%p296) target = $region52
      $region51: #{tpu_custom_call.1} parent=5 // pred_region
        %s299 = ssub.s32 %s17, 2
        // Predicated region
        $region53: #{tpu_custom_call.1} parent=51 // pred_check
          %p300 = pneg %p127
        $region54: #{tpu_custom_call.1} parent=51 // pred_check_branch
          %302 = sbr.rel (%p300) target = $region56
        $region55: #{tpu_custom_call.1} parent=51 // pred_region
          %s303 = sand.u32 %s112, 1
          %s304 = scalar_lea.sflag [#allocation5], %s303
          %s305 = sand.u32 %s112, 1
          %s306 = scalar_lea.vmem [#allocation8], %s305
          %307 = dma.done %s304, 16
        $region56: #{tpu_custom_call.1} parent=51 // pred_fallthru
          _
      $region52: #{tpu_custom_call.1} parent=5 // pred_fallthru
        _
    $region6: #{tpu_custom_call.1} parent=1 // loop_footer
      %s21 = sadd.s32 1, %s17
    $region7: #{tpu_custom_call.1} parent=1 // loop_footer_branch
      %16 = sbr.rel target = $region3
    $region8: #{tpu_custom_call.1} parent=1 // loop_exit
      _
    %308 = vsyncpa [#allocation4], 1
    %s309 = scalar_lea.sflag [#allocation4], 1
    %310 = vsyncpa %s309, 1
    %311 = vsyncpa [#allocation7], 1
    %s312 = scalar_lea.sflag [#allocation7], 1
    %313 = vsyncpa %s312, 1
    %314 = vsyncpa [#allocation5], 1
    %s315 = scalar_lea.sflag [#allocation5], 1
    %316 = vsyncpa %s315, 1

</llo_original>
